<compile_context>
chip_gen: v7x
topology: tpu7x:2x2x1
jax: 0.10.0
libtpu: 0.0.40
codegen_flags: <defaults>
</compile_context>

<pallas_src>
import functools

import jax
import jax.numpy as jnp
from jax import lax
from jax.experimental import pallas as pl
from jax.experimental.pallas import tpu as pltpu


_VMEM_LIMIT_BYTES = 32 * 1024 * 1024
_NEG_INF = -1e30  # large-negative instead of -inf: avoids nan even in degenerate tiles


def _qkv_proj_kernel(x_ref, wq_ref, wk_ref, wv_ref, q_ref, k_ref, v_ref, *, scale):
    """Project one (block_t, D) tile of x into Q (pre-scaled), K, V."""
    x = x_ref[...]
    q = jnp.dot(x, wq_ref[...], preferred_element_type=jnp.float32)
    q_ref[...] = (q * scale).astype(q_ref.dtype)
    k_ref[...] = jnp.dot(x, wk_ref[...], preferred_element_type=jnp.float32).astype(k_ref.dtype)
    v_ref[...] = jnp.dot(x, wv_ref[...], preferred_element_type=jnp.float32).astype(v_ref.dtype)


def _flash_kernel(q_ref, k_ref, v_ref, o_ref, m_sc, l_sc, acc_sc, *,
                  block_k, seq_len, needs_mask):
    # q_ref: (block_q, H) pre-scaled; k_ref/v_ref: (block_k, H); o_ref: (block_q, H)
    ki = pl.program_id(2)

    @pl.when(ki == 0)
    def _init():
        m_sc[...] = jnp.full_like(m_sc, -jnp.inf)
        l_sc[...] = jnp.zeros_like(l_sc)
        acc_sc[...] = jnp.zeros_like(acc_sc)

    # logits = q @ k^T, contracting the H axis directly (no transpose / XLU vxpose).
    s = lax.dot_general(q_ref[...], k_ref[...],
                        dimension_numbers=(((1,), (1,)), ((), ())),
                        preferred_element_type=jnp.float32)        # (block_q, block_k)

    if needs_mask:  # static python branch; only emitted when T was padded
        key_idx = ki * block_k + lax.broadcasted_iota(jnp.int32, s.shape, 1)
        s = jnp.where(key_idx < seq_len, s, _NEG_INF)

    # Online (streaming) softmax update.
    m_prev = m_sc[...]
    m_new = jnp.maximum(m_prev, jnp.max(s, axis=-1, keepdims=True))
    alpha = jnp.exp(m_prev - m_new)
    p = jnp.exp(s - m_new)
    l_sc[...] = alpha * l_sc[...] + jnp.sum(p, axis=-1, keepdims=True)
    # Cast probabilities to the (possibly bf16) value dtype for the MXU; accumulate in f32.
    acc_sc[...] = alpha * acc_sc[...] + jnp.dot(
        p.astype(v_ref.dtype), v_ref[...], preferred_element_type=jnp.float32)
    m_sc[...] = m_new

    @pl.when(ki == pl.num_programs(2) - 1)
    def _finalize():
        # Exact divide: runs once per query tile, so the approx reciprocal buys nothing.
        o_ref[...] = (acc_sc[...] / l_sc[...]).astype(o_ref.dtype)


def _round_up(x, m):
    return (x + m - 1) // m * m


def _preferred_block():
    # 128 matches v5e's 4x128^2 MXU / 16 MiB scoped-VMEM default; 256 matches v6e/v7x's
    # 2x256^2 MXU.
    try:
        kind = jax.devices()[0].device_kind.lower()
    except Exception:
        return 128
    return 128 if "v5" in kind else 256


def self_attention_head(x, w_key, w_query, w_value):
    """x: (B, T, d_model); w_*: (head_dim, d_model) as in nn.Linear (no bias)."""
    B, T, D = x.shape
    H = w_key.shape[0]
    scale = float(H) ** (-0.5)

    pref = _preferred_block()
    block_k = min(pref, _round_up(T, 128))
    T_pad = _round_up(T, block_k)
    block_q = block_k
    # v7x has 2 TensorCores: keep the parallel grid extent >= 2 whenever T allows.
    if B * (T_pad // block_q) < 2 and block_q > 128:
        block_q = 128

    needs_mask = T_pad != T
    x_p = jnp.pad(x, ((0, 0), (0, T_pad - T), (0, 0))) if needs_mask else x

    # nn.Linear stores weights as (head_dim, d_model) with y = x @ W.T.
    wq = w_query.T
    wk = w_key.T
    wv = w_value.T

    cparams_proj = pltpu.CompilerParams(
        dimension_semantics=("parallel", "parallel"),
        vmem_limit_bytes=_VMEM_LIMIT_BYTES)
    cparams_flash = pltpu.CompilerParams(
        dimension_semantics=("parallel", "parallel", "arbitrary"),
        vmem_limit_bytes=_VMEM_LIMIT_BYTES)

    # ---- Pass 1: hoisted Q/K/V projection (x read from HBM exactly once). ----
    block_t = block_k  # divides T_pad by construction
    q, k, v = pl.pallas_call(
        functools.partial(_qkv_proj_kernel, scale=scale),
        out_shape=(jax.ShapeDtypeStruct((B, T_pad, H), x.dtype),) * 3,
        grid_spec=pltpu.PrefetchScalarGridSpec(
            num_scalar_prefetch=0,
            grid=(B, T_pad // block_t),
            in_specs=[
                pl.BlockSpec((None, block_t, D), lambda b, ti: (b, ti, 0)),
                pl.BlockSpec((D, H), lambda b, ti: (0, 0)),
                pl.BlockSpec((D, H), lambda b, ti: (0, 0)),
                pl.BlockSpec((D, H), lambda b, ti: (0, 0)),
            ],
            out_specs=(
                pl.BlockSpec((None, block_t, H), lambda b, ti: (b, ti, 0)),
                pl.BlockSpec((None, block_t, H), lambda b, ti: (b, ti, 0)),
                pl.BlockSpec((None, block_t, H), lambda b, ti: (b, ti, 0)),
            ),
        ),
        compiler_params=cparams_proj,
    )(x_p, wq, wk, wv)

    # ---- Pass 2: flash attention over the pre-projected Q/K/V. ----
    out = pl.pallas_call(
        functools.partial(_flash_kernel, block_k=block_k, seq_len=T,
                          needs_mask=needs_mask),
        out_shape=jax.ShapeDtypeStruct((B, T_pad, H), x.dtype),
        grid_spec=pltpu.PrefetchScalarGridSpec(
            num_scalar_prefetch=0,
            grid=(B, T_pad // block_q, T_pad // block_k),
            in_specs=[
                pl.BlockSpec((None, block_q, H), lambda b, qi, ki: (b, qi, 0)),
                pl.BlockSpec((None, block_k, H), lambda b, qi, ki: (b, ki, 0)),
                pl.BlockSpec((None, block_k, H), lambda b, qi, ki: (b, ki, 0)),
            ],
            out_specs=pl.BlockSpec((None, block_q, H), lambda b, qi, ki: (b, qi, 0)),
            scratch_shapes=[
                pltpu.VMEM((block_q, 1), jnp.float32),   # running max m
                pltpu.VMEM((block_q, 1), jnp.float32),   # running denom l
                pltpu.VMEM((block_q, H), jnp.float32),   # output accumulator
            ],
        ),
        compiler_params=cparams_flash,
    )(q, k, v)

    return out[:, :T, :] if needs_mask else out


def _reference(x, w_key, w_query, w_value):
    # Pure-JAX reference mirroring the PyTorch forward (mask=None).
    k = jnp.einsum("btd,hd->bth", x, w_key)
    q = jnp.einsum("btd,hd->bth", x, w_query)
    v = jnp.einsum("btd,hd->bth", x, w_value)
    scale = w_key.shape[0] ** (-0.5)
    logits = jnp.einsum("bqh,bkh->bqk", q, k) * scale
    w = jax.nn.softmax(logits, axis=-1)
    return jnp.einsum("bqk,bkh->bqh", w, v)


if __name__ == "__main__":
    B, T, d_model, head_dim = 2, 8, 32, 16

    key = jax.random.PRNGKey(0)
    kx, kk, kq, kv = jax.random.split(key, 4)

    x = jax.random.normal(kx, (B, T, d_model), dtype=jnp.float32)
    # nn.Linear(d_model, head_dim, bias=False) -> weight shape (head_dim, d_model)
    bound = 1.0 / (d_model ** 0.5)
    w_key = jax.random.uniform(kk, (head_dim, d_model), jnp.float32, -bound, bound)
    w_query = jax.random.uniform(kq, (head_dim, d_model), jnp.float32, -bound, bound)
    w_value = jax.random.uniform(kv, (head_dim, d_model), jnp.float32, -bound, bound)

    out = self_attention_head(x, w_key, w_query, w_value)
    out = jax.block_until_ready(out)

    ref = _reference(x, w_key, w_query, w_value)
    assert out.shape == (B, T, head_dim)
    # Exact divide in finalize + f32 accumulation throughout -> tight tolerance.
    assert jnp.allclose(out, ref, atol=1e-4, rtol=1e-4), "mismatch vs reference"

    print("KERNEL_OK")
</pallas_src>

<mosaic_0001>
module attributes {stable_mosaic.version = 11 : i64} {
  func.func @_qkv_proj_kernel(%arg0: i32, %arg1: i32, %arg2: memref<1x128x32xf32, #tpu.memory_space<vmem>>, %arg3: memref<32x16xf32, #tpu.memory_space<vmem>>, %arg4: memref<32x16xf32, #tpu.memory_space<vmem>>, %arg5: memref<32x16xf32, #tpu.memory_space<vmem>>, %arg6: memref<1x128x16xf32, #tpu.memory_space<vmem>>, %arg7: memref<1x128x16xf32, #tpu.memory_space<vmem>>, %arg8: memref<1x128x16xf32, #tpu.memory_space<vmem>>) attributes {dimension_semantics = [#tpu.dimension_semantics<parallel>, #tpu.dimension_semantics<parallel>], iteration_bounds = array<i64: 2, 1>, scalar_prefetch = 0 : i64, scratch_operands = 0 : i64, tpu.core_type = #tpu.core_type<tc>, window_params = [{transform_indices = @transform_0, window_bounds = array<i64: 1, 128, 32>}, {pipeline_mode = #tpu.pipeline_mode<synchronous>, transform_indices = @transform_1, window_bounds = array<i64: 32, 16>}, {pipeline_mode = #tpu.pipeline_mode<synchronous>, transform_indices = @transform_2, window_bounds = array<i64: 32, 16>}, {pipeline_mode = #tpu.pipeline_mode<synchronous>, transform_indices = @transform_3, window_bounds = array<i64: 32, 16>}, {transform_indices = @transform_4, window_bounds = array<i64: 1, 128, 16>}, {transform_indices = @transform_5, window_bounds = array<i64: 1, 128, 16>}, {transform_indices = @transform_6, window_bounds = array<i64: 1, 128, 16>}]} {
    %c0 = arith.constant 0 : index
    %c0_0 = arith.constant 0 : index
    %c0_1 = arith.constant 0 : index
    %0 = vector.load %arg2[%c0, %c0_0, %c0_1] : memref<1x128x32xf32, #tpu.memory_space<vmem>>, vector<1x128x32xf32>
    %1 = vector.shape_cast %0 : vector<1x128x32xf32> to vector<128x32xf32>
    %c0_2 = arith.constant 0 : index
    %c0_3 = arith.constant 0 : index
    %2 = vector.load %arg3[%c0_2, %c0_3] : memref<32x16xf32, #tpu.memory_space<vmem>>, vector<32x16xf32>
    %cst = arith.constant dense<0.000000e+00> : vector<128x16xf32>
    %3 = tpu.matmul %1, %2, %cst {dimension_numbers = #tpu.dot_dimension_numbers<[1], [0], [0], [1], [0, 0, 1, 1], [], []>} : vector<128x32xf32>, vector<32x16xf32>, vector<128x16xf32> -> vector<128x16xf32>
    %cst_4 = arith.constant 2.500000e-01 : f32
    %4 = vector.broadcast %cst_4 : f32 to vector<128x16xf32>
    %5 = arith.mulf %3, %4 : vector<128x16xf32>
    %c0_5 = arith.constant 0 : index
    %c0_6 = arith.constant 0 : index
    %c0_7 = arith.constant 0 : index
    %6 = vector.load %arg6[%c0_5, %c0_6, %c0_7] : memref<1x128x16xf32, #tpu.memory_space<vmem>>, vector<1x128x16xf32>
    %7 = vector.shape_cast %6 : vector<1x128x16xf32> to vector<128x16xf32>
    %8 = vector.shape_cast %5 : vector<128x16xf32> to vector<1x128x16xf32>
    tpu.vector_store %arg6[%c0_5, %c0_6, %c0_7], %8 {strides = array<i32>} : memref<1x128x16xf32, #tpu.memory_space<vmem>>, vector<1x128x16xf32>,
    %c0_8 = arith.constant 0 : index
    %c0_9 = arith.constant 0 : index
    %9 = vector.load %arg4[%c0_8, %c0_9] : memref<32x16xf32, #tpu.memory_space<vmem>>, vector<32x16xf32>
    %cst_10 = arith.constant dense<0.000000e+00> : vector<128x16xf32>
    %10 = tpu.matmul %1, %9, %cst_10 {dimension_numbers = #tpu.dot_dimension_numbers<[1], [0], [0], [1], [0, 0, 1, 1], [], []>} : vector<128x32xf32>, vector<32x16xf32>, vector<128x16xf32> -> vector<128x16xf32>
    %c0_11 = arith.constant 0 : index
    %c0_12 = arith.constant 0 : index
    %c0_13 = arith.constant 0 : index
    %11 = vector.load %arg7[%c0_11, %c0_12, %c0_13] : memref<1x128x16xf32, #tpu.memory_space<vmem>>, vector<1x128x16xf32>
    %12 = vector.shape_cast %11 : vector<1x128x16xf32> to vector<128x16xf32>
    %13 = vector.shape_cast %10 : vector<128x16xf32> to vector<1x128x16xf32>
    tpu.vector_store %arg7[%c0_11, %c0_12, %c0_13], %13 {strides = array<i32>} : memref<1x128x16xf32, #tpu.memory_space<vmem>>, vector<1x128x16xf32>,
    %c0_14 = arith.constant 0 : index
    %c0_15 = arith.constant 0 : index
    %14 = vector.load %arg5[%c0_14, %c0_15] : memref<32x16xf32, #tpu.memory_space<vmem>>, vector<32x16xf32>
    %cst_16 = arith.constant dense<0.000000e+00> : vector<128x16xf32>
    %15 = tpu.matmul %1, %14, %cst_16 {dimension_numbers = #tpu.dot_dimension_numbers<[1], [0], [0], [1], [0, 0, 1, 1], [], []>} : vector<128x32xf32>, vector<32x16xf32>, vector<128x16xf32> -> vector<128x16xf32>
    %c0_17 = arith.constant 0 : index
    %c0_18 = arith.constant 0 : index
    %c0_19 = arith.constant 0 : index
    %16 = vector.load %arg8[%c0_17, %c0_18, %c0_19] : memref<1x128x16xf32, #tpu.memory_space<vmem>>, vector<1x128x16xf32>
    %17 = vector.shape_cast %16 : vector<1x128x16xf32> to vector<128x16xf32>
    %18 = vector.shape_cast %15 : vector<128x16xf32> to vector<1x128x16xf32>
    tpu.vector_store %arg8[%c0_17, %c0_18, %c0_19], %18 {strides = array<i32>} : memref<1x128x16xf32, #tpu.memory_space<vmem>>, vector<1x128x16xf32>,
    return
  }
  func.func @transform_0(%arg0: i32, %arg1: i32) -> (i32, i32, i32) {
    %c0_i32 = arith.constant 0 : i32
    %c0_i32_0 = arith.constant 0 : i32
    return %arg0, %arg1, %c0_i32 : i32, i32, i32
  }
  func.func @transform_1(%arg0: i32, %arg1: i32) -> (i32, i32) {
    %c0_i32 = arith.constant 0 : i32
    %c0_i32_0 = arith.constant 0 : i32
    %c0_i32_1 = arith.constant 0 : i32
    return %c0_i32, %c0_i32_0 : i32, i32
  }
  func.func @transform_2(%arg0: i32, %arg1: i32) -> (i32, i32) {
    %c0_i32 = arith.constant 0 : i32
    %c0_i32_0 = arith.constant 0 : i32
    %c0_i32_1 = arith.constant 0 : i32
    return %c0_i32, %c0_i32_0 : i32, i32
  }
  func.func @transform_3(%arg0: i32, %arg1: i32) -> (i32, i32) {
    %c0_i32 = arith.constant 0 : i32
    %c0_i32_0 = arith.constant 0 : i32
    %c0_i32_1 = arith.constant 0 : i32
    return %c0_i32, %c0_i32_0 : i32, i32
  }
  func.func @transform_4(%arg0: i32, %arg1: i32) -> (i32, i32, i32) {
    %c0_i32 = arith.constant 0 : i32
    %c0_i32_0 = arith.constant 0 : i32
    return %arg0, %arg1, %c0_i32 : i32, i32, i32
  }
  func.func @transform_5(%arg0: i32, %arg1: i32) -> (i32, i32, i32) {
    %c0_i32 = arith.constant 0 : i32
    %c0_i32_0 = arith.constant 0 : i32
    return %arg0, %arg1, %c0_i32 : i32, i32, i32
  }
  func.func @transform_6(%arg0: i32, %arg1: i32) -> (i32, i32, i32) {
    %c0_i32 = arith.constant 0 : i32
    %c0_i32_0 = arith.constant 0 : i32
    return %arg0, %arg1, %c0_i32 : i32, i32, i32
  }
}

</mosaic_0001>

<llo_original>
// kernel: tpu_custom_call.1
$region0: #{tpu_custom_call.1}
  #allocation0 [shape = 'u32[]', space=smem, size = 0x4, offset = 0x4, fixed_abs, tag = 'smem constant byte address 0x4 - core index']
  #allocation1 [shape = 'u32[144,128]{1,0:T(1,128)}', space=vmem, size = 0x12000, scoped, tag = 'internal scratch']
  %s0 = inlined_call_operand.vmem [shape: f32[2,128,32], index: 0, kind: input, shape index: {}]
  %s1 = inlined_call_operand.vmem [shape: f32[32,16], index: 1, kind: input, shape index: {}]
  %s2 = inlined_call_operand.vmem [shape: f32[32,16], index: 2, kind: input, shape index: {}]
  %s3 = inlined_call_operand.vmem [shape: f32[32,16], index: 3, kind: input, shape index: {}]
  %s4 = inlined_call_operand.vmem [shape: f32[2,128,16], index: 4, kind: output, shape index: {0}]
  %s5 = inlined_call_operand.vmem [shape: f32[2,128,16], index: 5, kind: output, shape index: {1}]
  %s6 = inlined_call_operand.vmem [shape: f32[2,128,16], index: 6, kind: output, shape index: {2}]
  %7 = xla_tuple %s4, %s5, %s6
  %s8 = sld [smem:[#allocation0]]
  $region65: #{tpu_custom_call.1} parent=0
    _
  %s10 = ssub.s32 1, %s8
  %s11 = scalar_select 0, %s10, %s8
  loop: start=0, step=1, limit=4
  $region2: #{tpu_custom_call.1} parent=0 // loop_pre_header
    _
  $region3: #{tpu_custom_call.1} parent=0 // loop_header
    %s13 = sphi 0, %s17
    %p14 = scmp.ge.s32.totalorder %s13, 4
    %s20 = sphi 0, %s32
    %s21 = sphi 0, %s28
    %s22 = sphi 0, %s20
    %s23 = sphi 0, %s21
    %s24 = sphi 0, %s22
    %s25 = sphi 0, %s23
    %s37 = sphi 0, %s39
    %s40 = sphi 0, %s37
    %s41 = sphi 0, %s40
    %s57 = sphi 0, %s41
    %s61 = sphi 0, %s61
    %s63 = sphi 0, %s61
    %s64 = sphi 0, %s63
    %s78 = sphi 0, %s64
    %s82 = sphi 0, %s82
    %s84 = sphi 0, %s82
    %s85 = sphi 0, %s84
    %s99 = sphi 0, %s85
    %s103 = sphi 0, %s103
    %s105 = sphi 0, %s103
    %s106 = sphi 0, %s105
    %s120 = sphi 0, %s106
    %s128 = sphi 0, %s130
    %s131 = sphi 0, %s128
    %s132 = sphi 0, %s131
    %s148 = sphi 0, %s132
    %s156 = sphi 0, %s158
    %s159 = sphi 0, %s156
    %s160 = sphi 0, %s159
    %s176 = sphi 0, %s160
    %s184 = sphi 0, %s186
    %s187 = sphi 0, %s184
    %s188 = sphi 0, %s187
    %s204 = sphi 0, %s188
  $region4: #{tpu_custom_call.1} parent=0 // loop_header_branch
    %16 = sbr.rel (%p14) target = $region8
  $region5: #{tpu_custom_call.1} parent=0 // loop_body
    %s18 = ssub.s32 %s13, 1
    %s19 = ssub.s32 %s13, 2
    %s26 = sadd.s32 1, %s21
    %p27 = scmp.ge.s32.totalorder %s26, 1
    %s28 = scalar_select %p27, 0, %s26
    %s29 = sadd.s32 1, %s20
    %s30 = scalar_select %p27, %s29, %s20
    %p31 = scmp.ge.s32.totalorder %s30, 2
    %s32 = scalar_select %p31, 0, %s30
    %s33 = ssub.s32 %s20, %s32
    %s34 = ssub.s32 %s21, %s28
    %s35 = sor.u32 %s33, %s34
    %p36 = scmp.eq.s32.totalorder %s35, 0
    %s38 = sadd.s32 %s37, 1
    %s39 = scalar_select %p36, %s37, %s38
    %p42 = pneg %p36
    %p43 = scmp.eq.s32.totalorder %s13, 1
    %p44 = por %p42, %p43
    %p45 = scmp.ne.s32.totalorder %s37, %s40
    %p46 = scmp.eq.s32.totalorder %s13, 0
    %p47 = por %p45, %p46
    %p48 = scmp.ne.s32.totalorder %s37, %s40
    %p49 = scmp.eq.s32.totalorder %s18, 1
    %p50 = por %p48, %p49
    %p51 = scmp.ne.s32.totalorder %s40, %s41
    %p52 = scmp.eq.s32.totalorder %s18, 0
    %p53 = por %p51, %p52
    %p54 = scmp.ne.s32.totalorder %s40, %s41
    %p55 = scmp.eq.s32.totalorder %s19, 1
    %p56 = por %p54, %p55
    %p58 = scmp.ne.s32.totalorder %s41, %s57
    %p59 = scmp.eq.s32.totalorder %s19, 0
    %p60 = por %p58, %p59
    %s62 = sadd.s32 %s61, 1
    %p65 = scmp.eq.s32.totalorder %s13, 1
    %p66 = scmp.ne.s32.totalorder %s61, %s63
    %p67 = scmp.eq.s32.totalorder %s13, 0
    %p68 = por %p66, %p67
    %p69 = scmp.ne.s32.totalorder %s61, %s63
    %p70 = scmp.eq.s32.totalorder %s18, 1
    %p71 = por %p69, %p70
    %p72 = scmp.ne.s32.totalorder %s63, %s64
    %p73 = scmp.eq.s32.totalorder %s18, 0
    %p74 = por %p72, %p73
    %p75 = scmp.ne.s32.totalorder %s63, %s64
    %p76 = scmp.eq.s32.totalorder %s19, 1
    %p77 = por %p75, %p76
    %p79 = scmp.ne.s32.totalorder %s64, %s78
    %p80 = scmp.eq.s32.totalorder %s19, 0
    %p81 = por %p79, %p80
    %s83 = sadd.s32 %s82, 1
    %p86 = scmp.eq.s32.totalorder %s13, 1
    %p87 = scmp.ne.s32.totalorder %s82, %s84
    %p88 = scmp.eq.s32.totalorder %s13, 0
    %p89 = por %p87, %p88
    %p90 = scmp.ne.s32.totalorder %s82, %s84
    %p91 = scmp.eq.s32.totalorder %s18, 1
    %p92 = por %p90, %p91
    %p93 = scmp.ne.s32.totalorder %s84, %s85
    %p94 = scmp.eq.s32.totalorder %s18, 0
    %p95 = por %p93, %p94
    %p96 = scmp.ne.s32.totalorder %s84, %s85
    %p97 = scmp.eq.s32.totalorder %s19, 1
    %p98 = por %p96, %p97
    %p100 = scmp.ne.s32.totalorder %s85, %s99
    %p101 = scmp.eq.s32.totalorder %s19, 0
    %p102 = por %p100, %p101
    %s104 = sadd.s32 %s103, 1
    %p107 = scmp.eq.s32.totalorder %s13, 1
    %p108 = scmp.ne.s32.totalorder %s103, %s105
    %p109 = scmp.eq.s32.totalorder %s13, 0
    %p110 = por %p108, %p109
    %p111 = scmp.ne.s32.totalorder %s103, %s105
    %p112 = scmp.eq.s32.totalorder %s18, 1
    %p113 = por %p111, %p112
    %p114 = scmp.ne.s32.totalorder %s105, %s106
    %p115 = scmp.eq.s32.totalorder %s18, 0
    %p116 = por %p114, %p115
    %p117 = scmp.ne.s32.totalorder %s105, %s106
    %p118 = scmp.eq.s32.totalorder %s19, 1
    %p119 = por %p117, %p118
    %p121 = scmp.ne.s32.totalorder %s106, %s120
    %p122 = scmp.eq.s32.totalorder %s19, 0
    %p123 = por %p121, %p122
    %s124 = ssub.s32 %s20, %s32
    %s125 = ssub.s32 %s21, %s28
    %s126 = sor.u32 %s124, %s125
    %p127 = scmp.eq.s32.totalorder %s126, 0
    %s129 = sadd.s32 %s128, 1
    %s130 = scalar_select %p127, %s128, %s129
    %p133 = pneg %p127
    %p134 = scmp.eq.s32.totalorder %s13, 1
    %p135 = por %p133, %p134
    %p136 = scmp.ne.s32.totalorder %s128, %s131
    %p137 = scmp.eq.s32.totalorder %s13, 0
    %p138 = por %p136, %p137
    %p139 = scmp.ne.s32.totalorder %s128, %s131
    %p140 = scmp.eq.s32.totalorder %s18, 1
    %p141 = por %p139, %p140
    %p142 = scmp.ne.s32.totalorder %s131, %s132
    %p143 = scmp.eq.s32.totalorder %s18, 0
    %p144 = por %p142, %p143
    %p145 = scmp.ne.s32.totalorder %s131, %s132
    %p146 = scmp.eq.s32.totalorder %s19, 1
    %p147 = por %p145, %p146
    %p149 = scmp.ne.s32.totalorder %s132, %s148
    %p150 = scmp.eq.s32.totalorder %s19, 0
    %p151 = por %p149, %p150
    %s152 = ssub.s32 %s20, %s32
    %s153 = ssub.s32 %s21, %s28
    %s154 = sor.u32 %s152, %s153
    %p155 = scmp.eq.s32.totalorder %s154, 0
    %s157 = sadd.s32 %s156, 1
    %s158 = scalar_select %p155, %s156, %s157
    %p161 = pneg %p155
    %p162 = scmp.eq.s32.totalorder %s13, 1
    %p163 = por %p161, %p162
    %p164 = scmp.ne.s32.totalorder %s156, %s159
    %p165 = scmp.eq.s32.totalorder %s13, 0
    %p166 = por %p164, %p165
    %p167 = scmp.ne.s32.totalorder %s156, %s159
    %p168 = scmp.eq.s32.totalorder %s18, 1
    %p169 = por %p167, %p168
    %p170 = scmp.ne.s32.totalorder %s159, %s160
    %p171 = scmp.eq.s32.totalorder %s18, 0
    %p172 = por %p170, %p171
    %p173 = scmp.ne.s32.totalorder %s159, %s160
    %p174 = scmp.eq.s32.totalorder %s19, 1
    %p175 = por %p173, %p174
    %p177 = scmp.ne.s32.totalorder %s160, %s176
    %p178 = scmp.eq.s32.totalorder %s19, 0
    %p179 = por %p177, %p178
    %s180 = ssub.s32 %s20, %s32
    %s181 = ssub.s32 %s21, %s28
    %s182 = sor.u32 %s180, %s181
    %p183 = scmp.eq.s32.totalorder %s182, 0
    %s185 = sadd.s32 %s184, 1
    %s186 = scalar_select %p183, %s184, %s185
    %p189 = pneg %p183
    %p190 = scmp.eq.s32.totalorder %s13, 1
    %p191 = por %p189, %p190
    %p192 = scmp.ne.s32.totalorder %s184, %s187
    %p193 = scmp.eq.s32.totalorder %s13, 0
    %p194 = por %p192, %p193
    %p195 = scmp.ne.s32.totalorder %s184, %s187
    %p196 = scmp.eq.s32.totalorder %s18, 1
    %p197 = por %p195, %p196
    %p198 = scmp.ne.s32.totalorder %s187, %s188
    %p199 = scmp.eq.s32.totalorder %s18, 0
    %p200 = por %p198, %p199
    %p201 = scmp.ne.s32.totalorder %s187, %s188
    %p202 = scmp.eq.s32.totalorder %s19, 1
    %p203 = por %p201, %p202
    %p205 = scmp.ne.s32.totalorder %s188, %s204
    %p206 = scmp.eq.s32.totalorder %s19, 0
    %p207 = por %p205, %p206
    %p208 = scmp.le.s32.totalorder 1, %s13
    %p209 = scmp.lt.s32.totalorder %s13, 3
    %p210 = pnand %p208, %p209
    %p211 = pneg %p210
    // Predicated region
    $region9: #{tpu_custom_call.1} parent=5 // pred_check
      _
    $region10: #{tpu_custom_call.1} parent=5 // pred_check_branch
      %213 = sbr.rel (%p210) target = $region12
    $region11: #{tpu_custom_call.1} parent=5 // pred_region
      %s214 = ssub.s32 %s13, 1
      // Predicated region
      $region13: #{tpu_custom_call.1} parent=11 // pred_check
        %p215 = pneg %p74
      $region14: #{tpu_custom_call.1} parent=11 // pred_check_branch
        %217 = sbr.rel (%p215) target = $region16
      $region15: #{tpu_custom_call.1} parent=11 // pred_region
        _
      $region16: #{tpu_custom_call.1} parent=11 // pred_fallthru
        _
      // Predicated region
      $region17: #{tpu_custom_call.1} parent=11 // pred_check
        %p218 = pneg %p95
      $region18: #{tpu_custom_call.1} parent=11 // pred_check_branch
        %220 = sbr.rel (%p218) target = $region20
      $region19: #{tpu_custom_call.1} parent=11 // pred_region
        _
      $region20: #{tpu_custom_call.1} parent=11 // pred_fallthru
        _
      // Predicated region
      $region21: #{tpu_custom_call.1} parent=11 // pred_check
        %p221 = pneg %p116
      $region22: #{tpu_custom_call.1} parent=11 // pred_check_branch
        %223 = sbr.rel (%p221) target = $region24
      $region23: #{tpu_custom_call.1} parent=11 // pred_region
        _
      $region24: #{tpu_custom_call.1} parent=11 // pred_fallthru
        _
    $region12: #{tpu_custom_call.1} parent=5 // pred_fallthru
      _
    %p224 = scmp.lt.s32.totalorder %s13, 2
    // Predicated region
    $region25: #{tpu_custom_call.1} parent=5 // pred_check
      %p225 = pneg %p224
    $region26: #{tpu_custom_call.1} parent=5 // pred_check_branch
      %227 = sbr.rel (%p225) target = $region28
    $region27: #{tpu_custom_call.1} parent=5 // pred_region
      // Predicated region
      $region29: #{tpu_custom_call.1} parent=27 // pred_check
        %p228 = pneg %p47
      $region30: #{tpu_custom_call.1} parent=27 // pred_check_branch
        %230 = sbr.rel (%p228) target = $region32
      $region31: #{tpu_custom_call.1} parent=27 // pred_region
        %s231 = smul.u32 16, %s21
        %p232 = scmp.lt.s32.totalorder %s20, 1
        %s233 = scalar_select %p232, %s20, 1
        %p234 = scmp.lt.s32.totalorder %s231, 15
        %s235 = scalar_select %p234, %s231, 15
        %s236 = smul.addr %s233, 16
        %s237 = sadd.s32 %s235, %s236
        %s238 = smul.addr %s237, 8
        %s239 = scalar_lea.vmem %s0, %s238
        %s240 = smul.u32 16, %s21
      $region32: #{tpu_custom_call.1} parent=27 // pred_fallthru
        _
    $region28: #{tpu_custom_call.1} parent=5 // pred_fallthru
      _
    %p241 = scmp.le.s32.totalorder 1, %s13
    %p242 = scmp.lt.s32.totalorder %s13, 3
    %p243 = pnand %p241, %p242
    %p244 = pneg %p243
    // Predicated region
    $region33: #{tpu_custom_call.1} parent=5 // pred_check
      _
    $region34: #{tpu_custom_call.1} parent=5 // pred_check_branch
      %246 = sbr.rel (%p243) target = $region36
    $region35: #{tpu_custom_call.1} parent=5 // pred_region
      %s247 = ssub.s32 %s13, 1
      %s248 = smul.u32 16, %s23
      %p249 = scmp.lt.s32.totalorder %s22, 1
      %s250 = scalar_select %p249, %s22, 1
      %p251 = scmp.lt.s32.totalorder %s248, 15
      %s252 = scalar_select %p251, %s248, 15
      %s253 = smul.addr %s250, 16
      %s254 = sadd.s32 %s252, %s253
      %s255 = smul.addr %s254, 8
      %s256 = scalar_lea.vmem %s0, %s255
      %p257 = pneg %p53
      %p258 = pneg %p50
      %p259 = pneg %p74
      %p260 = pneg %p71
      %p261 = pneg %p95
      %p262 = pneg %p92
      %p263 = pneg %p116
      %p264 = pneg %p113
      %p265 = pneg %p144
      %p266 = pneg %p141
      %s267 = smul.u32 16, %s23
      %p268 = scmp.lt.s32.totalorder %s22, 1
      %s269 = scalar_select %p268, %s22, 1
      %p270 = scmp.lt.s32.totalorder %s267, 15
      %s271 = scalar_select %p270, %s267, 15
      %s272 = smul.addr %s269, 16
      %s273 = sadd.s32 %s271, %s272
      %s274 = smul.addr %s273, 8
      %s275 = scalar_lea.vmem %s4, %s274
      %p276 = pneg %p172
      %p277 = pneg %p169
      %s278 = smul.u32 16, %s23
      %p279 = scmp.lt.s32.totalorder %s22, 1
      %s280 = scalar_select %p279, %s22, 1
      %p281 = scmp.lt.s32.totalorder %s278, 15
      %s282 = scalar_select %p281, %s278, 15
      %s283 = smul.addr %s280, 16
      %s284 = sadd.s32 %s282, %s283
      %s285 = smul.addr %s284, 8
      %s286 = scalar_lea.vmem %s5, %s285
      %p287 = pneg %p200
      %p288 = pneg %p197
      %s289 = smul.u32 16, %s23
      %p290 = scmp.lt.s32.totalorder %s22, 1
      %s291 = scalar_select %p290, %s22, 1
      %p292 = scmp.lt.s32.totalorder %s289, 15
      %s293 = scalar_select %p292, %s289, 15
      %s294 = smul.addr %s291, 16
      %s295 = sadd.s32 %s293, %s294
      %s296 = smul.addr %s295, 8
      %s297 = scalar_lea.vmem %s6, %s296
      %s298 = smul.u32 16, %s23
      %p299 = scmp.lt.s32.totalorder %s22, 1
      %s300 = scalar_select %p299, %s22, 1
      %p301 = scmp.lt.s32.totalorder %s298, 15
      %s302 = scalar_select %p301, %s298, 15
      %s303 = smul.addr %s300, 16
      %s304 = sadd.s32 %s302, %s303
      %s305 = smul.addr %s304, 8
      %s306 = scalar_lea.vmem %s0, %s305
      %s307 = smul.u32 16, %s23
      %s308 = smul.u32 16, %s23
      %p309 = scmp.lt.s32.totalorder %s22, 1
      %s310 = scalar_select %p309, %s22, 1
      %p311 = scmp.lt.s32.totalorder %s308, 15
      %s312 = scalar_select %p311, %s308, 15
      %s313 = smul.addr %s310, 16
      %s314 = sadd.s32 %s312, %s313
      %s315 = smul.addr %s314, 8
      %s316 = scalar_lea.vmem %s4, %s315
      %s317 = smul.u32 16, %s23
      %s318 = smul.u32 16, %s23
      %p319 = scmp.lt.s32.totalorder %s22, 1
      %s320 = scalar_select %p319, %s22, 1
      %p321 = scmp.lt.s32.totalorder %s318, 15
      %s322 = scalar_select %p321, %s318, 15
      %s323 = smul.addr %s320, 16
      %s324 = sadd.s32 %s322, %s323
      %s325 = smul.addr %s324, 8
      %s326 = scalar_lea.vmem %s5, %s325
      %s327 = smul.u32 16, %s23
      %s328 = smul.u32 16, %s23
      %p329 = scmp.lt.s32.totalorder %s22, 1
      %s330 = scalar_select %p329, %s22, 1
      %p331 = scmp.lt.s32.totalorder %s328, 15
      %s332 = scalar_select %p331, %s328, 15
      %s333 = smul.addr %s330, 16
      %s334 = sadd.s32 %s332, %s333
      %s335 = smul.addr %s334, 8
      %s336 = scalar_lea.vmem %s6, %s335
      %s337 = smul.u32 16, %s23
      %v338 = vld [vmem:[%s306] sm:$0xff]
      %v339 = vld [vmem:[%s306 + $0x8] sm:$0xff]
      %v340 = vld [vmem:[%s306 + $0x10] sm:$0xff]
      %v341 = vld [vmem:[%s306 + $0x18] sm:$0xff]
      %v342 = vld [vmem:[%s306 + $0x20] sm:$0xff]
      %v343 = vld [vmem:[%s306 + $0x28] sm:$0xff]
      %v344 = vld [vmem:[%s306 + $0x30] sm:$0xff]
      %v345 = vld [vmem:[%s306 + $0x38] sm:$0xff]
      %v346 = vld [vmem:[%s306 + $0x40] sm:$0xff]
      %v347 = vld [vmem:[%s306 + $0x48] sm:$0xff]
      %v348 = vld [vmem:[%s306 + $0x50] sm:$0xff]
      %v349 = vld [vmem:[%s306 + $0x58] sm:$0xff]
      %v350 = vld [vmem:[%s306 + $0x60] sm:$0xff]
      %v351 = vld [vmem:[%s306 + $0x68] sm:$0xff]
      %v352 = vld [vmem:[%s306 + $0x70] sm:$0xff]
      %v353 = vld [vmem:[%s306 + $0x78] sm:$0xff]
      %v354 = vld [vmem:[%s1] sm:$0xff]
      %v355 = vld [vmem:[%s1 + $0x8] sm:$0xff]
      %v356 = vld [vmem:[%s1 + $0x10] sm:$0xff]
      %v357 = vld [vmem:[%s1 + $0x18] sm:$0xff]
      %vm358 = vcmask 261120
      %v360 = vsel %vm358, %v338, 0
      %v363 = vsel %vm358, %v339, 0
      %v366 = vsel %vm358, %v340, 0
      %v369 = vsel %vm358, %v341, 0
      %v372 = vsel %vm358, %v342, 0
      %v375 = vsel %vm358, %v343, 0
      %v378 = vsel %vm358, %v344, 0
      %v381 = vsel %vm358, %v345, 0
      %v384 = vsel %vm358, %v346, 0
      %v387 = vsel %vm358, %v347, 0
      %v390 = vsel %vm358, %v348, 0
      %v393 = vsel %vm358, %v349, 0
      %v396 = vsel %vm358, %v350, 0
      %v399 = vsel %vm358, %v351, 0
      %v402 = vsel %vm358, %v352, 0
      %v405 = vsel %vm358, %v353, 0
      %407 = vmatprep.subr.mxu0 0.0
      %408 = vmatpush1.msra.mxu0 %v354
      %409 = vmatprep.subr.mxu0 0.0
      %410 = vmatpush1.msra.mxu0 %v355
      %411 = vmatprep.subr.mxu0 0.0
      %412 = vmatpush1.msra.mxu0 %v356
      %413 = vmatprep.subr.mxu0 0.0
      %414 = vmatpush1.msra.mxu0 %v357
      %415 = vmatprep.subr.mxu0 0.0
      %416 = vmatpush1.msra.mxu0 0.0
      %417 = vmatprep.subr.mxu0 0.0
      %418 = vmatpush1.msra.mxu0 0.0
      %419 = vmatprep.subr.mxu0 0.0
      %420 = vmatpush1.msra.mxu0 0.0
      %421 = vmatprep.subr.mxu0 0.0
      %422 = vmatpush1.msra.mxu0 0.0
      %423 = vmatprep.subr.mxu0 0.0
      %424 = vmatpush1.msra.mxu0 0.0
      %425 = vmatprep.subr.mxu0 0.0
      %426 = vmatpush1.msra.mxu0 0.0
      %427 = vmatprep.subr.mxu0 0.0
      %428 = vmatpush1.msra.mxu0 0.0
      %429 = vmatprep.subr.mxu0 0.0
      %430 = vmatpush1.msra.mxu0 0.0
      %431 = vmatprep.subr.mxu0 0.0
      %432 = vmatpush1.msra.mxu0 0.0
      %433 = vmatprep.subr.mxu0 0.0
      %434 = vmatpush1.msra.mxu0 0.0
      %435 = vmatprep.subr.mxu0 0.0
      %436 = vmatpush1.msra.mxu0 0.0
      %437 = vmatprep.subr.mxu0 0.0
      %438 = vmatpush1.msra.mxu0 0.0
      %439 = vmatprep.subr.mxu0 0.0
      %440 = vmatpush1.msra.mxu0 0.0
      %441 = vmatprep.subr.mxu0 0.0
      %442 = vmatpush1.msra.mxu0 0.0
      %443 = vmatprep.subr.mxu0 0.0
      %444 = vmatpush1.msra.mxu0 0.0
      %445 = vmatprep.subr.mxu0 0.0
      %446 = vmatpush1.msra.mxu0 0.0
      %447 = vmatprep.subr.mxu0 0.0
      %448 = vmatpush1.msra.mxu0 0.0
      %449 = vmatprep.subr.mxu0 0.0
      %450 = vmatpush1.msra.mxu0 0.0
      %451 = vmatprep.subr.mxu0 0.0
      %452 = vmatpush1.msra.mxu0 0.0
      %453 = vmatprep.subr.mxu0 0.0
      %454 = vmatpush1.msra.mxu0 0.0
      %455 = vmatprep.subr.mxu0 0.0
      %456 = vmatpush1.msra.mxu0 0.0
      %457 = vmatprep.subr.mxu0 0.0
      %458 = vmatpush1.msra.mxu0 0.0
      %459 = vmatprep.subr.mxu0 0.0
      %460 = vmatpush1.msra.mxu0 0.0
      %461 = vmatprep.subr.mxu0 0.0
      %462 = vmatpush1.msra.mxu0 0.0
      %463 = vmatprep.subr.mxu0 0.0
      %464 = vmatpush1.msra.mxu0 0.0
      %465 = vmatprep.subr.mxu0 0.0
      %466 = vmatpush1.msra.mxu0 0.0
      %467 = vmatprep.subr.mxu0 0.0
      %468 = vmatpush1.msra.mxu0 0.0
      %469 = vmatprep.subr.mxu0 0.0
      %470 = vmatpush1.msra.mxu0 0.0
      %471 = vmatprep.mubr.f32.mxu0 0.0
      %472 = vmatmul.mubr.f32.gmra.mrb[0].mxu0 %v360
      %v473 = vpop.f32.mrb[0].mxu0
      %v474 = vadd.f32 0.0, %v473
      %v475 = vpop.f32.mrb[0].mxu0
      %476 = vmatprep.mubr.f32.mxu0 0.0
      %477 = vmatmul.mubr.f32.gmra.mrb[0].mxu0 %v363
      %v478 = vpop.f32.mrb[0].mxu0
      %v479 = vadd.f32 0.0, %v478
      %v480 = vpop.f32.mrb[0].mxu0
      %481 = vmatprep.mubr.f32.mxu0 0.0
      %482 = vmatmul.mubr.f32.gmra.mrb[0].mxu0 %v366
      %v483 = vpop.f32.mrb[0].mxu0
      %v484 = vadd.f32 0.0, %v483
      %v485 = vpop.f32.mrb[0].mxu0
      %486 = vmatprep.mubr.f32.mxu0 0.0
      %487 = vmatmul.mubr.f32.gmra.mrb[0].mxu0 %v369
      %v488 = vpop.f32.mrb[0].mxu0
      %v489 = vadd.f32 0.0, %v488
      %v490 = vpop.f32.mrb[0].mxu0
      %491 = vmatprep.mubr.f32.mxu0 0.0
      %492 = vmatmul.mubr.f32.gmra.mrb[0].mxu0 %v372
      %v493 = vpop.f32.mrb[0].mxu0
      %v494 = vadd.f32 0.0, %v493
      %v495 = vpop.f32.mrb[0].mxu0
      %496 = vmatprep.mubr.f32.mxu0 0.0
      %497 = vmatmul.mubr.f32.gmra.mrb[0].mxu0 %v375
      %v498 = vpop.f32.mrb[0].mxu0
      %v499 = vadd.f32 0.0, %v498
      %v500 = vpop.f32.mrb[0].mxu0
      %501 = vmatprep.mubr.f32.mxu0 0.0
      %502 = vmatmul.mubr.f32.gmra.mrb[0].mxu0 %v378
      %v503 = vpop.f32.mrb[0].mxu0
      %v504 = vadd.f32 0.0, %v503
      %v505 = vpop.f32.mrb[0].mxu0
      %506 = vmatprep.mubr.f32.mxu0 0.0
      %507 = vmatmul.mubr.f32.gmra.mrb[0].mxu0 %v381
      %v508 = vpop.f32.mrb[0].mxu0
      %v509 = vadd.f32 0.0, %v508
      %v510 = vpop.f32.mrb[0].mxu0
      %511 = vmatprep.mubr.f32.mxu0 0.0
      %512 = vmatmul.mubr.f32.gmra.mrb[0].mxu0 %v384
      %v513 = vpop.f32.mrb[0].mxu0
      %v514 = vadd.f32 0.0, %v513
      %v515 = vpop.f32.mrb[0].mxu0
      %516 = vmatprep.mubr.f32.mxu0 0.0
      %517 = vmatmul.mubr.f32.gmra.mrb[0].mxu0 %v387
      %v518 = vpop.f32.mrb[0].mxu0
      %v519 = vadd.f32 0.0, %v518
      %v520 = vpop.f32.mrb[0].mxu0
      %521 = vmatprep.mubr.f32.mxu0 0.0
      %522 = vmatmul.mubr.f32.gmra.mrb[0].mxu0 %v390
      %v523 = vpop.f32.mrb[0].mxu0
      %v524 = vadd.f32 0.0, %v523
      %v525 = vpop.f32.mrb[0].mxu0
      %526 = vmatprep.mubr.f32.mxu0 0.0
      %527 = vmatmul.mubr.f32.gmra.mrb[0].mxu0 %v393
      %v528 = vpop.f32.mrb[0].mxu0
      %v529 = vadd.f32 0.0, %v528
      %v530 = vpop.f32.mrb[0].mxu0
      %531 = vmatprep.mubr.f32.mxu0 0.0
      %532 = vmatmul.mubr.f32.gmra.mrb[0].mxu0 %v396
      %v533 = vpop.f32.mrb[0].mxu0
      %v534 = vadd.f32 0.0, %v533
      %v535 = vpop.f32.mrb[0].mxu0
      %536 = vmatprep.mubr.f32.mxu0 0.0
      %537 = vmatmul.mubr.f32.gmra.mrb[0].mxu0 %v399
      %v538 = vpop.f32.mrb[0].mxu0
      %v539 = vadd.f32 0.0, %v538
      %v540 = vpop.f32.mrb[0].mxu0
      %541 = vmatprep.mubr.f32.mxu0 0.0
      %542 = vmatmul.mubr.f32.gmra.mrb[0].mxu0 %v402
      %v543 = vpop.f32.mrb[0].mxu0
      %v544 = vadd.f32 0.0, %v543
      %v545 = vpop.f32.mrb[0].mxu0
      %546 = vmatprep.mubr.f32.mxu0 0.0
      %547 = vmatmul.mubr.f32.gmra.mrb[0].mxu0 %v405
      %v548 = vpop.f32.mrb[0].mxu0
      %v549 = vadd.f32 0.0, %v548
      %v550 = vpop.f32.mrb[0].mxu0
      %551 = vdwg.mxu0
      %v552 = vmul.f32 %v474, 0.25
      %v553 = vmul.f32 %v479, 0.25
      %v554 = vmul.f32 %v484, 0.25
      %v555 = vmul.f32 %v489, 0.25
      %v556 = vmul.f32 %v494, 0.25
      %v557 = vmul.f32 %v499, 0.25
      %v558 = vmul.f32 %v504, 0.25
      %v559 = vmul.f32 %v509, 0.25
      %v560 = vmul.f32 %v514, 0.25
      %v561 = vmul.f32 %v519, 0.25
      %v562 = vmul.f32 %v524, 0.25
      %v563 = vmul.f32 %v529, 0.25
      %v564 = vmul.f32 %v534, 0.25
      %v565 = vmul.f32 %v539, 0.25
      %v566 = vmul.f32 %v544, 0.25
      %v567 = vmul.f32 %v549, 0.25
      %vm568 = vcmask 130048
      %569 = vst.msk [vmem:[%s316] sm:$0xff] %vm568, %v552
      %570 = vst.msk [vmem:[%s316 + $0x8] sm:$0xff] %vm568, %v553
      %571 = vst.msk [vmem:[%s316 + $0x10] sm:$0xff] %vm568, %v554
      %572 = vst.msk [vmem:[%s316 + $0x18] sm:$0xff] %vm568, %v555
      %573 = vst.msk [vmem:[%s316 + $0x20] sm:$0xff] %vm568, %v556
      %574 = vst.msk [vmem:[%s316 + $0x28] sm:$0xff] %vm568, %v557
      %575 = vst.msk [vmem:[%s316 + $0x30] sm:$0xff] %vm568, %v558
      %576 = vst.msk [vmem:[%s316 + $0x38] sm:$0xff] %vm568, %v559
      %577 = vst.msk [vmem:[%s316 + $0x40] sm:$0xff] %vm568, %v560
      %578 = vst.msk [vmem:[%s316 + $0x48] sm:$0xff] %vm568, %v561
      %579 = vst.msk [vmem:[%s316 + $0x50] sm:$0xff] %vm568, %v562
      %580 = vst.msk [vmem:[%s316 + $0x58] sm:$0xff] %vm568, %v563
      %581 = vst.msk [vmem:[%s316 + $0x60] sm:$0xff] %vm568, %v564
      %582 = vst.msk [vmem:[%s316 + $0x68] sm:$0xff] %vm568, %v565
      %583 = vst.msk [vmem:[%s316 + $0x70] sm:$0xff] %vm568, %v566
      %584 = vst.msk [vmem:[%s316 + $0x78] sm:$0xff] %vm568, %v567
      %v585 = vld [vmem:[%s2] sm:$0xff]
      %v586 = vld [vmem:[%s2 + $0x8] sm:$0xff]
      %v587 = vld [vmem:[%s2 + $0x10] sm:$0xff]
      %v588 = vld [vmem:[%s2 + $0x18] sm:$0xff]
      %589 = vmatprep.subr.mxu0 0.0
      %590 = vmatpush1.msra.mxu0 %v585
      %591 = vmatprep.subr.mxu0 0.0
      %592 = vmatpush1.msra.mxu0 %v586
      %593 = vmatprep.subr.mxu0 0.0
      %594 = vmatpush1.msra.mxu0 %v587
      %595 = vmatprep.subr.mxu0 0.0
      %596 = vmatpush1.msra.mxu0 %v588
      %597 = vmatprep.subr.mxu0 0.0
      %598 = vmatpush1.msra.mxu0 0.0
      %599 = vmatprep.subr.mxu0 0.0
      %600 = vmatpush1.msra.mxu0 0.0
      %601 = vmatprep.subr.mxu0 0.0
      %602 = vmatpush1.msra.mxu0 0.0
      %603 = vmatprep.subr.mxu0 0.0
      %604 = vmatpush1.msra.mxu0 0.0
      %605 = vmatprep.subr.mxu0 0.0
      %606 = vmatpush1.msra.mxu0 0.0
      %607 = vmatprep.subr.mxu0 0.0
      %608 = vmatpush1.msra.mxu0 0.0
      %609 = vmatprep.subr.mxu0 0.0
      %610 = vmatpush1.msra.mxu0 0.0
      %611 = vmatprep.subr.mxu0 0.0
      %612 = vmatpush1.msra.mxu0 0.0
      %613 = vmatprep.subr.mxu0 0.0
      %614 = vmatpush1.msra.mxu0 0.0
      %615 = vmatprep.subr.mxu0 0.0
      %616 = vmatpush1.msra.mxu0 0.0
      %617 = vmatprep.subr.mxu0 0.0
      %618 = vmatpush1.msra.mxu0 0.0
      %619 = vmatprep.subr.mxu0 0.0
      %620 = vmatpush1.msra.mxu0 0.0
      %621 = vmatprep.subr.mxu0 0.0
      %622 = vmatpush1.msra.mxu0 0.0
      %623 = vmatprep.subr.mxu0 0.0
      %624 = vmatpush1.msra.mxu0 0.0
      %625 = vmatprep.subr.mxu0 0.0
      %626 = vmatpush1.msra.mxu0 0.0
      %627 = vmatprep.subr.mxu0 0.0
      %628 = vmatpush1.msra.mxu0 0.0
      %629 = vmatprep.subr.mxu0 0.0
      %630 = vmatpush1.msra.mxu0 0.0
      %631 = vmatprep.subr.mxu0 0.0
      %632 = vmatpush1.msra.mxu0 0.0
      %633 = vmatprep.subr.mxu0 0.0
      %634 = vmatpush1.msra.mxu0 0.0
      %635 = vmatprep.subr.mxu0 0.0
      %636 = vmatpush1.msra.mxu0 0.0
      %637 = vmatprep.subr.mxu0 0.0
      %638 = vmatpush1.msra.mxu0 0.0
      %639 = vmatprep.subr.mxu0 0.0
      %640 = vmatpush1.msra.mxu0 0.0
      %641 = vmatprep.subr.mxu0 0.0
      %642 = vmatpush1.msra.mxu0 0.0
      %643 = vmatprep.subr.mxu0 0.0
      %644 = vmatpush1.msra.mxu0 0.0
      %645 = vmatprep.subr.mxu0 0.0
      %646 = vmatpush1.msra.mxu0 0.0
      %647 = vmatprep.subr.mxu0 0.0
      %648 = vmatpush1.msra.mxu0 0.0
      %649 = vmatprep.subr.mxu0 0.0
      %650 = vmatpush1.msra.mxu0 0.0
      %651 = vmatprep.subr.mxu0 0.0
      %652 = vmatpush1.msra.mxu0 0.0
      %653 = vmatprep.mubr.f32.mxu0 0.0
      %654 = vmatmul.mubr.f32.gmra.mrb[0].mxu0 %v360
      %v655 = vpop.f32.mrb[0].mxu0
      %v656 = vadd.f32 0.0, %v655
      %v657 = vpop.f32.mrb[0].mxu0
      %658 = vmatprep.mubr.f32.mxu0 0.0
      %659 = vmatmul.mubr.f32.gmra.mrb[0].mxu0 %v363
      %v660 = vpop.f32.mrb[0].mxu0
      %v661 = vadd.f32 0.0, %v660
      %v662 = vpop.f32.mrb[0].mxu0
      %663 = vmatprep.mubr.f32.mxu0 0.0
      %664 = vmatmul.mubr.f32.gmra.mrb[0].mxu0 %v366
      %v665 = vpop.f32.mrb[0].mxu0
      %v666 = vadd.f32 0.0, %v665
      %v667 = vpop.f32.mrb[0].mxu0
      %668 = vmatprep.mubr.f32.mxu0 0.0
      %669 = vmatmul.mubr.f32.gmra.mrb[0].mxu0 %v369
      %v670 = vpop.f32.mrb[0].mxu0
      %v671 = vadd.f32 0.0, %v670
      %v672 = vpop.f32.mrb[0].mxu0
      %673 = vmatprep.mubr.f32.mxu0 0.0
      %674 = vmatmul.mubr.f32.gmra.mrb[0].mxu0 %v372
      %v675 = vpop.f32.mrb[0].mxu0
      %v676 = vadd.f32 0.0, %v675
      %v677 = vpop.f32.mrb[0].mxu0
      %678 = vmatprep.mubr.f32.mxu0 0.0
      %679 = vmatmul.mubr.f32.gmra.mrb[0].mxu0 %v375
      %v680 = vpop.f32.mrb[0].mxu0
      %v681 = vadd.f32 0.0, %v680
      %v682 = vpop.f32.mrb[0].mxu0
      %683 = vmatprep.mubr.f32.mxu0 0.0
      %684 = vmatmul.mubr.f32.gmra.mrb[0].mxu0 %v378
      %v685 = vpop.f32.mrb[0].mxu0
      %v686 = vadd.f32 0.0, %v685
      %v687 = vpop.f32.mrb[0].mxu0
      %688 = vmatprep.mubr.f32.mxu0 0.0
      %689 = vmatmul.mubr.f32.gmra.mrb[0].mxu0 %v381
      %v690 = vpop.f32.mrb[0].mxu0
      %v691 = vadd.f32 0.0, %v690
      %v692 = vpop.f32.mrb[0].mxu0
      %693 = vmatprep.mubr.f32.mxu0 0.0
      %694 = vmatmul.mubr.f32.gmra.mrb[0].mxu0 %v384
      %v695 = vpop.f32.mrb[0].mxu0
      %v696 = vadd.f32 0.0, %v695
      %v697 = vpop.f32.mrb[0].mxu0
      %698 = vmatprep.mubr.f32.mxu0 0.0
      %699 = vmatmul.mubr.f32.gmra.mrb[0].mxu0 %v387
      %v700 = vpop.f32.mrb[0].mxu0
      %v701 = vadd.f32 0.0, %v700
      %v702 = vpop.f32.mrb[0].mxu0
      %703 = vmatprep.mubr.f32.mxu0 0.0
      %704 = vmatmul.mubr.f32.gmra.mrb[0].mxu0 %v390
      %v705 = vpop.f32.mrb[0].mxu0
      %v706 = vadd.f32 0.0, %v705
      %v707 = vpop.f32.mrb[0].mxu0
      %708 = vmatprep.mubr.f32.mxu0 0.0
      %709 = vmatmul.mubr.f32.gmra.mrb[0].mxu0 %v393
      %v710 = vpop.f32.mrb[0].mxu0
      %v711 = vadd.f32 0.0, %v710
      %v712 = vpop.f32.mrb[0].mxu0
      %713 = vmatprep.mubr.f32.mxu0 0.0
      %714 = vmatmul.mubr.f32.gmra.mrb[0].mxu0 %v396
      %v715 = vpop.f32.mrb[0].mxu0
      %v716 = vadd.f32 0.0, %v715
      %v717 = vpop.f32.mrb[0].mxu0
      %718 = vmatprep.mubr.f32.mxu0 0.0
      %719 = vmatmul.mubr.f32.gmra.mrb[0].mxu0 %v399
      %v720 = vpop.f32.mrb[0].mxu0
      %v721 = vadd.f32 0.0, %v720
      %v722 = vpop.f32.mrb[0].mxu0
      %723 = vmatprep.mubr.f32.mxu0 0.0
      %724 = vmatmul.mubr.f32.gmra.mrb[0].mxu0 %v402
      %v725 = vpop.f32.mrb[0].mxu0
      %v726 = vadd.f32 0.0, %v725
      %v727 = vpop.f32.mrb[0].mxu0
      %728 = vmatprep.mubr.f32.mxu0 0.0
      %729 = vmatmul.mubr.f32.gmra.mrb[0].mxu0 %v405
      %v730 = vpop.f32.mrb[0].mxu0
      %v731 = vadd.f32 0.0, %v730
      %v732 = vpop.f32.mrb[0].mxu0
      %733 = vdwg.mxu0
      %734 = vst.msk [vmem:[%s326] sm:$0xff] %vm568, %v656
      %735 = vst.msk [vmem:[%s326 + $0x8] sm:$0xff] %vm568, %v661
      %736 = vst.msk [vmem:[%s326 + $0x10] sm:$0xff] %vm568, %v666
      %737 = vst.msk [vmem:[%s326 + $0x18] sm:$0xff] %vm568, %v671
      %738 = vst.msk [vmem:[%s326 + $0x20] sm:$0xff] %vm568, %v676
      %739 = vst.msk [vmem:[%s326 + $0x28] sm:$0xff] %vm568, %v681
      %740 = vst.msk [vmem:[%s326 + $0x30] sm:$0xff] %vm568, %v686
      %741 = vst.msk [vmem:[%s326 + $0x38] sm:$0xff] %vm568, %v691
      %742 = vst.msk [vmem:[%s326 + $0x40] sm:$0xff] %vm568, %v696
      %743 = vst.msk [vmem:[%s326 + $0x48] sm:$0xff] %vm568, %v701
      %744 = vst.msk [vmem:[%s326 + $0x50] sm:$0xff] %vm568, %v706
      %745 = vst.msk [vmem:[%s326 + $0x58] sm:$0xff] %vm568, %v711
      %746 = vst.msk [vmem:[%s326 + $0x60] sm:$0xff] %vm568, %v716
      %747 = vst.msk [vmem:[%s326 + $0x68] sm:$0xff] %vm568, %v721
      %748 = vst.msk [vmem:[%s326 + $0x70] sm:$0xff] %vm568, %v726
      %749 = vst.msk [vmem:[%s326 + $0x78] sm:$0xff] %vm568, %v731
      %v750 = vld [vmem:[%s3] sm:$0xff]
      %v751 = vld [vmem:[%s3 + $0x8] sm:$0xff]
      %v752 = vld [vmem:[%s3 + $0x10] sm:$0xff]
      %v753 = vld [vmem:[%s3 + $0x18] sm:$0xff]
      %754 = vmatprep.subr.mxu0 0.0
      %755 = vmatpush1.msra.mxu0 %v750
      %756 = vmatprep.subr.mxu0 0.0
      %757 = vmatpush1.msra.mxu0 %v751
      %758 = vmatprep.subr.mxu0 0.0
      %759 = vmatpush1.msra.mxu0 %v752
      %760 = vmatprep.subr.mxu0 0.0
      %761 = vmatpush1.msra.mxu0 %v753
      %762 = vmatprep.subr.mxu0 0.0
      %763 = vmatpush1.msra.mxu0 0.0
      %764 = vmatprep.subr.mxu0 0.0
      %765 = vmatpush1.msra.mxu0 0.0
      %766 = vmatprep.subr.mxu0 0.0
      %767 = vmatpush1.msra.mxu0 0.0
      %768 = vmatprep.subr.mxu0 0.0
      %769 = vmatpush1.msra.mxu0 0.0
      %770 = vmatprep.subr.mxu0 0.0
      %771 = vmatpush1.msra.mxu0 0.0
      %772 = vmatprep.subr.mxu0 0.0
      %773 = vmatpush1.msra.mxu0 0.0
      %774 = vmatprep.subr.mxu0 0.0
      %775 = vmatpush1.msra.mxu0 0.0
      %776 = vmatprep.subr.mxu0 0.0
      %777 = vmatpush1.msra.mxu0 0.0
      %778 = vmatprep.subr.mxu0 0.0
      %779 = vmatpush1.msra.mxu0 0.0
      %780 = vmatprep.subr.mxu0 0.0
      %781 = vmatpush1.msra.mxu0 0.0
      %782 = vmatprep.subr.mxu0 0.0
      %783 = vmatpush1.msra.mxu0 0.0
      %784 = vmatprep.subr.mxu0 0.0
      %785 = vmatpush1.msra.mxu0 0.0
      %786 = vmatprep.subr.mxu0 0.0
      %787 = vmatpush1.msra.mxu0 0.0
      %788 = vmatprep.subr.mxu0 0.0
      %789 = vmatpush1.msra.mxu0 0.0
      %790 = vmatprep.subr.mxu0 0.0
      %791 = vmatpush1.msra.mxu0 0.0
      %792 = vmatprep.subr.mxu0 0.0
      %793 = vmatpush1.msra.mxu0 0.0
      %794 = vmatprep.subr.mxu0 0.0
      %795 = vmatpush1.msra.mxu0 0.0
      %796 = vmatprep.subr.mxu0 0.0
      %797 = vmatpush1.msra.mxu0 0.0
      %798 = vmatprep.subr.mxu0 0.0
      %799 = vmatpush1.msra.mxu0 0.0
      %800 = vmatprep.subr.mxu0 0.0
      %801 = vmatpush1.msra.mxu0 0.0
      %802 = vmatprep.subr.mxu0 0.0
      %803 = vmatpush1.msra.mxu0 0.0
      %804 = vmatprep.subr.mxu0 0.0
      %805 = vmatpush1.msra.mxu0 0.0
      %806 = vmatprep.subr.mxu0 0.0
      %807 = vmatpush1.msra.mxu0 0.0
      %808 = vmatprep.subr.mxu0 0.0
      %809 = vmatpush1.msra.mxu0 0.0
      %810 = vmatprep.subr.mxu0 0.0
      %811 = vmatpush1.msra.mxu0 0.0
      %812 = vmatprep.subr.mxu0 0.0
      %813 = vmatpush1.msra.mxu0 0.0
      %814 = vmatprep.subr.mxu0 0.0
      %815 = vmatpush1.msra.mxu0 0.0
      %816 = vmatprep.subr.mxu0 0.0
      %817 = vmatpush1.msra.mxu0 0.0
      %818 = vmatprep.mubr.f32.mxu0 0.0
      %819 = vmatmul.mubr.f32.gmra.mrb[0].mxu0 %v360
      %v820 = vpop.f32.mrb[0].mxu0
      %v821 = vadd.f32 0.0, %v820
      %v822 = vpop.f32.mrb[0].mxu0
      %823 = vmatprep.mubr.f32.mxu0 0.0
      %824 = vmatmul.mubr.f32.gmra.mrb[0].mxu0 %v363
      %v825 = vpop.f32.mrb[0].mxu0
      %v826 = vadd.f32 0.0, %v825
      %v827 = vpop.f32.mrb[0].mxu0
      %828 = vmatprep.mubr.f32.mxu0 0.0
      %829 = vmatmul.mubr.f32.gmra.mrb[0].mxu0 %v366
      %v830 = vpop.f32.mrb[0].mxu0
      %v831 = vadd.f32 0.0, %v830
      %v832 = vpop.f32.mrb[0].mxu0
      %833 = vmatprep.mubr.f32.mxu0 0.0
      %834 = vmatmul.mubr.f32.gmra.mrb[0].mxu0 %v369
      %v835 = vpop.f32.mrb[0].mxu0
      %v836 = vadd.f32 0.0, %v835
      %v837 = vpop.f32.mrb[0].mxu0
      %838 = vmatprep.mubr.f32.mxu0 0.0
      %839 = vmatmul.mubr.f32.gmra.mrb[0].mxu0 %v372
      %v840 = vpop.f32.mrb[0].mxu0
      %v841 = vadd.f32 0.0, %v840
      %v842 = vpop.f32.mrb[0].mxu0
      %843 = vmatprep.mubr.f32.mxu0 0.0
      %844 = vmatmul.mubr.f32.gmra.mrb[0].mxu0 %v375
      %v845 = vpop.f32.mrb[0].mxu0
      %v846 = vadd.f32 0.0, %v845
      %v847 = vpop.f32.mrb[0].mxu0
      %848 = vmatprep.mubr.f32.mxu0 0.0
      %849 = vmatmul.mubr.f32.gmra.mrb[0].mxu0 %v378
      %v850 = vpop.f32.mrb[0].mxu0
      %v851 = vadd.f32 0.0, %v850
      %v852 = vpop.f32.mrb[0].mxu0
      %853 = vmatprep.mubr.f32.mxu0 0.0
      %854 = vmatmul.mubr.f32.gmra.mrb[0].mxu0 %v381
      %v855 = vpop.f32.mrb[0].mxu0
      %v856 = vadd.f32 0.0, %v855
      %v857 = vpop.f32.mrb[0].mxu0
      %858 = vmatprep.mubr.f32.mxu0 0.0
      %859 = vmatmul.mubr.f32.gmra.mrb[0].mxu0 %v384
      %v860 = vpop.f32.mrb[0].mxu0
      %v861 = vadd.f32 0.0, %v860
      %v862 = vpop.f32.mrb[0].mxu0
      %863 = vmatprep.mubr.f32.mxu0 0.0
      %864 = vmatmul.mubr.f32.gmra.mrb[0].mxu0 %v387
      %v865 = vpop.f32.mrb[0].mxu0
      %v866 = vadd.f32 0.0, %v865
      %v867 = vpop.f32.mrb[0].mxu0
      %868 = vmatprep.mubr.f32.mxu0 0.0
      %869 = vmatmul.mubr.f32.gmra.mrb[0].mxu0 %v390
      %v870 = vpop.f32.mrb[0].mxu0
      %v871 = vadd.f32 0.0, %v870
      %v872 = vpop.f32.mrb[0].mxu0
      %873 = vmatprep.mubr.f32.mxu0 0.0
      %874 = vmatmul.mubr.f32.gmra.mrb[0].mxu0 %v393
      %v875 = vpop.f32.mrb[0].mxu0
      %v876 = vadd.f32 0.0, %v875
      %v877 = vpop.f32.mrb[0].mxu0
      %878 = vmatprep.mubr.f32.mxu0 0.0
      %879 = vmatmul.mubr.f32.gmra.mrb[0].mxu0 %v396
      %v880 = vpop.f32.mrb[0].mxu0
      %v881 = vadd.f32 0.0, %v880
      %v882 = vpop.f32.mrb[0].mxu0
      %883 = vmatprep.mubr.f32.mxu0 0.0
      %884 = vmatmul.mubr.f32.gmra.mrb[0].mxu0 %v399
      %v885 = vpop.f32.mrb[0].mxu0
      %v886 = vadd.f32 0.0, %v885
      %v887 = vpop.f32.mrb[0].mxu0
      %888 = vmatprep.mubr.f32.mxu0 0.0
      %889 = vmatmul.mubr.f32.gmra.mrb[0].mxu0 %v402
      %v890 = vpop.f32.mrb[0].mxu0
      %v891 = vadd.f32 0.0, %v890
      %v892 = vpop.f32.mrb[0].mxu0
      %893 = vmatprep.mubr.f32.mxu0 0.0
      %894 = vmatmul.mubr.f32.gmra.mrb[0].mxu0 %v405
      %v895 = vpop.f32.mrb[0].mxu0
      %v896 = vadd.f32 0.0, %v895
      %v897 = vpop.f32.mrb[0].mxu0
      %898 = vdwg.mxu0
      %899 = vst.msk [vmem:[%s336] sm:$0xff] %vm568, %v821
      %900 = vst.msk [vmem:[%s336 + $0x8] sm:$0xff] %vm568, %v826
      %901 = vst.msk [vmem:[%s336 + $0x10] sm:$0xff] %vm568, %v831
      %902 = vst.msk [vmem:[%s336 + $0x18] sm:$0xff] %vm568, %v836
      %903 = vst.msk [vmem:[%s336 + $0x20] sm:$0xff] %vm568, %v841
      %904 = vst.msk [vmem:[%s336 + $0x28] sm:$0xff] %vm568, %v846
      %905 = vst.msk [vmem:[%s336 + $0x30] sm:$0xff] %vm568, %v851
      %906 = vst.msk [vmem:[%s336 + $0x38] sm:$0xff] %vm568, %v856
      %907 = vst.msk [vmem:[%s336 + $0x40] sm:$0xff] %vm568, %v861
      %908 = vst.msk [vmem:[%s336 + $0x48] sm:$0xff] %vm568, %v866
      %909 = vst.msk [vmem:[%s336 + $0x50] sm:$0xff] %vm568, %v871
      %910 = vst.msk [vmem:[%s336 + $0x58] sm:$0xff] %vm568, %v876
      %911 = vst.msk [vmem:[%s336 + $0x60] sm:$0xff] %vm568, %v881
      %912 = vst.msk [vmem:[%s336 + $0x68] sm:$0xff] %vm568, %v886
      %913 = vst.msk [vmem:[%s336 + $0x70] sm:$0xff] %vm568, %v891
      %914 = vst.msk [vmem:[%s336 + $0x78] sm:$0xff] %vm568, %v896
      %s915 = smul.u32 16, %s23
      %p916 = scmp.lt.s32.totalorder %s22, 1
      %s917 = scalar_select %p916, %s22, 1
      %p918 = scmp.lt.s32.totalorder %s915, 15
      %s919 = scalar_select %p918, %s915, 15
      %s920 = smul.addr %s917, 16
      %s921 = sadd.s32 %s919, %s920
      %s922 = smul.addr %s921, 8
      %s923 = scalar_lea.vmem %s4, %s922
      %s924 = smul.u32 16, %s23
      %p925 = scmp.lt.s32.totalorder %s22, 1
      %s926 = scalar_select %p925, %s22, 1
      %p927 = scmp.lt.s32.totalorder %s924, 15
      %s928 = scalar_select %p927, %s924, 15
      %s929 = smul.addr %s926, 16
      %s930 = sadd.s32 %s928, %s929
      %s931 = smul.addr %s930, 8
      %s932 = scalar_lea.vmem %s5, %s931
      %s933 = smul.u32 16, %s23
      %p934 = scmp.lt.s32.totalorder %s22, 1
      %s935 = scalar_select %p934, %s22, 1
      %p936 = scmp.lt.s32.totalorder %s933, 15
      %s937 = scalar_select %p936, %s933, 15
      %s938 = smul.addr %s935, 16
      %s939 = sadd.s32 %s937, %s938
      %s940 = smul.addr %s939, 8
      %s941 = scalar_lea.vmem %s6, %s940
      // Predicated region
      $region37: #{tpu_custom_call.1} parent=35 // pred_check
        %p942 = pneg %p141
      $region38: #{tpu_custom_call.1} parent=35 // pred_check_branch
        %944 = sbr.rel (%p942) target = $region40
      $region39: #{tpu_custom_call.1} parent=35 // pred_region
        %s945 = smul.u32 16, %s23
      $region40: #{tpu_custom_call.1} parent=35 // pred_fallthru
        _
      // Predicated region
      $region41: #{tpu_custom_call.1} parent=35 // pred_check
        %p946 = pneg %p169
      $region42: #{tpu_custom_call.1} parent=35 // pred_check_branch
        %948 = sbr.rel (%p946) target = $region44
      $region43: #{tpu_custom_call.1} parent=35 // pred_region
        %s949 = smul.u32 16, %s23
      $region44: #{tpu_custom_call.1} parent=35 // pred_fallthru
        _
      // Predicated region
      $region45: #{tpu_custom_call.1} parent=35 // pred_check
        %p950 = pneg %p197
      $region46: #{tpu_custom_call.1} parent=35 // pred_check_branch
        %952 = sbr.rel (%p950) target = $region48
      $region47: #{tpu_custom_call.1} parent=35 // pred_region
        %s953 = smul.u32 16, %s23
      $region48: #{tpu_custom_call.1} parent=35 // pred_fallthru
        _
    $region36: #{tpu_custom_call.1} parent=5 // pred_fallthru
      _
    %p954 = scmp.le.s32.totalorder 2, %s13
    // Predicated region
    $region49: #{tpu_custom_call.1} parent=5 // pred_check
      %p955 = pneg %p954
    $region50: #{tpu_custom_call.1} parent=5 // pred_check_branch
      %957 = sbr.rel (%p955) target = $region52
    $region51: #{tpu_custom_call.1} parent=5 // pred_region
      %s958 = ssub.s32 %s13, 2
      // Predicated region
      $region53: #{tpu_custom_call.1} parent=51 // pred_check
        %p959 = pneg %p147
      $region54: #{tpu_custom_call.1} parent=51 // pred_check_branch
        %961 = sbr.rel (%p959) target = $region56
      $region55: #{tpu_custom_call.1} parent=51 // pred_region
        %s962 = smul.u32 16, %s25
        %p963 = scmp.lt.s32.totalorder %s24, 1
        %s964 = scalar_select %p963, %s24, 1
        %p965 = scmp.lt.s32.totalorder %s962, 15
        %s966 = scalar_select %p965, %s962, 15
        %s967 = smul.addr %s964, 16
        %s968 = sadd.s32 %s966, %s967
        %s969 = smul.addr %s968, 8
        %s970 = scalar_lea.vmem %s4, %s969
      $region56: #{tpu_custom_call.1} parent=51 // pred_fallthru
        _
      // Predicated region
      $region57: #{tpu_custom_call.1} parent=51 // pred_check
        %p971 = pneg %p175
      $region58: #{tpu_custom_call.1} parent=51 // pred_check_branch
        %973 = sbr.rel (%p971) target = $region60
      $region59: #{tpu_custom_call.1} parent=51 // pred_region
        %s974 = smul.u32 16, %s25
        %p975 = scmp.lt.s32.totalorder %s24, 1
        %s976 = scalar_select %p975, %s24, 1
        %p977 = scmp.lt.s32.totalorder %s974, 15
        %s978 = scalar_select %p977, %s974, 15
        %s979 = smul.addr %s976, 16
        %s980 = sadd.s32 %s978, %s979
        %s981 = smul.addr %s980, 8
        %s982 = scalar_lea.vmem %s5, %s981
      $region60: #{tpu_custom_call.1} parent=51 // pred_fallthru
        _
      // Predicated region
      $region61: #{tpu_custom_call.1} parent=51 // pred_check
        %p983 = pneg %p203
      $region62: #{tpu_custom_call.1} parent=51 // pred_check_branch
        %985 = sbr.rel (%p983) target = $region64
      $region63: #{tpu_custom_call.1} parent=51 // pred_region
        %s986 = smul.u32 16, %s25
        %p987 = scmp.lt.s32.totalorder %s24, 1
        %s988 = scalar_select %p987, %s24, 1
        %p989 = scmp.lt.s32.totalorder %s986, 15
        %s990 = scalar_select %p989, %s986, 15
        %s991 = smul.addr %s988, 16
        %s992 = sadd.s32 %s990, %s991
        %s993 = smul.addr %s992, 8
        %s994 = scalar_lea.vmem %s6, %s993
      $region64: #{tpu_custom_call.1} parent=51 // pred_fallthru
        _
    $region52: #{tpu_custom_call.1} parent=5 // pred_fallthru
      _
  $region6: #{tpu_custom_call.1} parent=0 // loop_footer
    %s17 = sadd.s32 1, %s13
  $region7: #{tpu_custom_call.1} parent=0 // loop_footer_branch
    %12 = sbr.rel target = $region3
  $region8: #{tpu_custom_call.1} parent=0 // loop_exit
    _

</llo_original>
